<compile_context>
chip_gen: v7x
topology: tpu7x:2x2x1
jax: 0.10.0
libtpu: 0.0.40
codegen_flags: <defaults>
</compile_context>

<pallas_src>
import jax
import jax.numpy as jnp
from jax.experimental import pallas as pl
from jax.experimental.pallas import tpu as pltpu

# Problem configuration (matches CBAM(channels=32, reduction=16, kernel_size=7))
B, C, H, W = 2, 32, 16, 16
HW = H * W
RED = 16
CR = C // RED            # hidden width of the channel-attention MLP (=2)
KS = 7                   # spatial-attention conv kernel size
PAD = KS // 2


def cbam_kernel(x_ref, wfc_ref, cm_ref, o_ref):
    # x_ref:  (B, C, HW) VMEM (NCHW flattened; 256 lanes minor)
    # wfc_ref: (2, C, CR) VMEM, stacked [w1, w2^T]
    # cm_ref: (2, HW, HW) VMEM, padding-aware conv matrices for the [avg, max] maps
    w1 = wfc_ref[0]                                           # (C, CR)
    w2t = wfc_ref[1]                                          # (C, CR)
    cm_avg = cm_ref[0]                                        # (HW, HW)
    cm_max = cm_ref[1]                                        # (HW, HW)

    for b in range(B):       # static unroll; batch fused into one kernel invocation
        x = x_ref[b]                                          # (C, HW) float32

        # ---------------- Channel attention (VPU) ----------------
        avg_c = jnp.mean(x, axis=1, keepdims=True)            # (C, 1)  lane reduce
        max_c = jnp.max(x, axis=1, keepdims=True)             # (C, 1)
        # fc1 + ReLU on both pooled vectors, shared fc2 (== fc(avg) + fc(max)).
        h = (jnp.maximum(jnp.sum(w1 * avg_c, axis=0, keepdims=True), 0.0)
             + jnp.maximum(jnp.sum(w1 * max_c, axis=0, keepdims=True), 0.0))   # (1, CR)
        ca = jax.nn.sigmoid(jnp.sum(w2t * h, axis=1, keepdims=True))           # (C, 1)
        x_ca = x * ca                                         # gate over HW lanes

        # ---------------- Spatial attention (MXU) ----------------
        avg_sp = jnp.mean(x_ca, axis=0, keepdims=True)        # (1, HW) sublane reduce
        max_sp = jnp.max(x_ca, axis=0, keepdims=True)         # (1, HW)
        # 7x7 zero-padded conv over the 2-channel pooled map == two small matmuls.
        acc = (jnp.dot(avg_sp, cm_avg, preferred_element_type=jnp.float32)
               + jnp.dot(max_sp, cm_max, preferred_element_type=jnp.float32))  # (1, HW)
        attn = jax.nn.sigmoid(acc)                            # (1, HW)

        o_ref[b] = (x_ca * attn).astype(o_ref.dtype)          # broadcast over C sublanes


def build_conv_matrices(wconv):
    """(1, 2, KS, KS) OIHW conv weights -> (2, HW, HW) zero-padding-aware matrices.

    acc = avg_map @ M[0] + max_map @ M[1] reproduces
    Conv2d(2, 1, KS, padding=KS//2, bias=False) (cross-correlation; zero padding is
    baked in as zeroed entries)."""
    w = wconv[0]                                    # (2, KS, KS)
    si = jnp.arange(H).reshape(H, 1, 1, 1)          # source row
    sj = jnp.arange(W).reshape(1, W, 1, 1)          # source col
    oi = jnp.arange(H).reshape(1, 1, H, 1)          # output row
    oj = jnp.arange(W).reshape(1, 1, 1, W)          # output col
    ki = si - oi + PAD
    kj = sj - oj + PAD
    valid = (ki >= 0) & (ki < KS) & (kj >= 0) & (kj < KS)             # (H, W, H, W)
    taps = w[:, jnp.clip(ki, 0, KS - 1), jnp.clip(kj, 0, KS - 1)]     # (2, H, W, H, W)
    m = jnp.where(valid[None], taps, 0.0)
    return m.reshape(2, HW, HW).astype(jnp.float32)


def cbam_forward(x_nchw, w1, w2, wconv):
    """x_nchw: (B, C, H, W) float32 (PyTorch layout). Returns NCHW output."""
    b, c, h, w = x_nchw.shape
    hw = h * w
    x = x_nchw.reshape(b, c, hw)                         # free reshape, stays NCHW
    wfc = jnp.stack([w1, jnp.transpose(w2)], axis=0)     # (2, C, CR) — tiny weight prep
    conv_mat = build_conv_matrices(wconv)                # (2, HW, HW), 512 KiB

    out = pl.pallas_call(
        cbam_kernel,
        out_shape=jax.ShapeDtypeStruct((b, c, hw), x.dtype),
        grid=(1,),
        in_specs=[
            pl.BlockSpec((b, c, hw), lambda i: (0, 0, 0)),
            pl.BlockSpec((2, c, CR), lambda i: (0, 0, 0)),
            pl.BlockSpec((2, hw, hw), lambda i: (0, 0, 0)),
        ],
        out_specs=pl.BlockSpec((b, c, hw), lambda i: (0, 0, 0)),
        compiler_params=pltpu.CompilerParams(dimension_semantics=("arbitrary",)),
    )(x, wfc, conv_mat)

    return out.reshape(b, c, h, w)                       # free reshape back to NCHW


def cbam_reference(x, w1, w2, wconv):
    """Pure-JAX reference mirroring the PyTorch module (NCHW)."""
    avg = jnp.mean(x, axis=(2, 3))
    mx = jnp.max(x, axis=(2, 3))

    def fc(v):
        return jnp.maximum(v @ w1, 0.0) @ w2

    ca = jax.nn.sigmoid(fc(avg) + fc(mx))                # (B, C)
    x_ca = x * ca[:, :, None, None]

    avg_sp = jnp.mean(x_ca, axis=1, keepdims=True)
    max_sp = jnp.max(x_ca, axis=1, keepdims=True)
    amap = jnp.concatenate([avg_sp, max_sp], axis=1)     # (B, 2, H, W)
    conv = jax.lax.conv_general_dilated(
        amap, wconv, window_strides=(1, 1),
        padding=((PAD, PAD), (PAD, PAD)),
        dimension_numbers=("NCHW", "OIHW", "NCHW"))
    sa = jax.nn.sigmoid(conv)                            # (B, 1, H, W)
    return x_ca * sa


if __name__ == "__main__":
    key = jax.random.PRNGKey(0)
    k_x, k_w1, k_w2, k_wc = jax.random.split(key, 4)

    x = jax.random.normal(k_x, (B, C, H, W), dtype=jnp.float32)
    # Deterministic synthetic parameters (shapes match the torch module's __init__).
    w1 = jax.random.normal(k_w1, (C, CR), dtype=jnp.float32) * 0.1   # Linear(C, C//r).weight.T
    w2 = jax.random.normal(k_w2, (CR, C), dtype=jnp.float32) * 0.1   # Linear(C//r, C).weight.T
    wconv = jax.random.normal(k_wc, (1, 2, KS, KS), dtype=jnp.float32) * 0.1  # Conv2d(2,1,7)

    out = cbam_forward(x, w1, w2, wconv)
    out = jax.block_until_ready(out)

    ref = cbam_reference(x, w1, w2, wconv)
    assert out.shape == (B, C, H, W)
    assert jnp.allclose(out, ref, atol=1e-4, rtol=1e-4), "Pallas CBAM mismatch vs reference"

    print("KERNEL_OK")
</pallas_src>

<mosaic_0001>
module attributes {stable_mosaic.version = 11 : i64} {
  func.func @cbam_kernel(%arg0: i32, %arg1: memref<2x32x256xf32, #tpu.memory_space<vmem>>, %arg2: memref<2x32x2xf32, #tpu.memory_space<vmem>>, %arg3: memref<2x256x256xf32, #tpu.memory_space<vmem>>, %arg4: memref<2x32x256xf32, #tpu.memory_space<vmem>>) attributes {dimension_semantics = [#tpu.dimension_semantics<arbitrary>], iteration_bounds = array<i64: 1>, scalar_prefetch = 0 : i64, scratch_operands = 0 : i64, tpu.core_type = #tpu.core_type<tc>, window_params = [{pipeline_mode = #tpu.pipeline_mode<synchronous>, transform_indices = @transform_0, window_bounds = array<i64: 2, 32, 256>}, {pipeline_mode = #tpu.pipeline_mode<synchronous>, transform_indices = @transform_1, window_bounds = array<i64: 2, 32, 2>}, {pipeline_mode = #tpu.pipeline_mode<synchronous>, transform_indices = @transform_2, window_bounds = array<i64: 2, 256, 256>}, {pipeline_mode = #tpu.pipeline_mode<synchronous>, transform_indices = @transform_3, window_bounds = array<i64: 2, 32, 256>}]} {
    %c0 = arith.constant 0 : index
    %c0_0 = arith.constant 0 : index
    %c0_1 = arith.constant 0 : index
    %0 = vector.load %arg2[%c0, %c0_0, %c0_1] : memref<2x32x2xf32, #tpu.memory_space<vmem>>, vector<1x32x2xf32>
    %1 = vector.shape_cast %0 : vector<1x32x2xf32> to vector<32x2xf32>
    %c1 = arith.constant 1 : index
    %c0_2 = arith.constant 0 : index
    %c0_3 = arith.constant 0 : index
    %2 = vector.load %arg2[%c1, %c0_2, %c0_3] : memref<2x32x2xf32, #tpu.memory_space<vmem>>, vector<1x32x2xf32>
    %3 = vector.shape_cast %2 : vector<1x32x2xf32> to vector<32x2xf32>
    %c0_4 = arith.constant 0 : index
    %c0_5 = arith.constant 0 : index
    %c0_6 = arith.constant 0 : index
    %4 = vector.load %arg3[%c0_4, %c0_5, %c0_6] : memref<2x256x256xf32, #tpu.memory_space<vmem>>, vector<1x256x256xf32>
    %5 = vector.shape_cast %4 : vector<1x256x256xf32> to vector<256x256xf32>
    %c1_7 = arith.constant 1 : index
    %c0_8 = arith.constant 0 : index
    %c0_9 = arith.constant 0 : index
    %6 = vector.load %arg3[%c1_7, %c0_8, %c0_9] : memref<2x256x256xf32, #tpu.memory_space<vmem>>, vector<1x256x256xf32>
    %7 = vector.shape_cast %6 : vector<1x256x256xf32> to vector<256x256xf32>
    %c0_10 = arith.constant 0 : index
    %c0_11 = arith.constant 0 : index
    %c0_12 = arith.constant 0 : index
    %8 = vector.load %arg1[%c0_10, %c0_11, %c0_12] : memref<2x32x256xf32, #tpu.memory_space<vmem>>, vector<1x32x256xf32>
    %9 = vector.shape_cast %8 : vector<1x32x256xf32> to vector<32x256xf32>
    %cst = arith.constant dense<0.000000e+00> : vector<32xf32>
    %10 = vector.multi_reduction <add>, %9, %cst [1] : vector<32x256xf32> to vector<32xf32>
    %11 = vector.shape_cast %10 : vector<32xf32> to vector<32x1xf32>
    %cst_13 = arith.constant 2.560000e+02 : f32
    %12 = vector.broadcast %cst_13 : f32 to vector<32x1xf32>
    %13 = arith.divf %11, %12 : vector<32x1xf32>
    %cst_14 = arith.constant dense<0xFF800000> : vector<32xf32>
    %14 = vector.multi_reduction <maximumf>, %9, %cst_14 [1] : vector<32x256xf32> to vector<32xf32>
    %15 = vector.shape_cast %14 : vector<32xf32> to vector<32x1xf32>
    %16 = vector.broadcast %13 : vector<32x1xf32> to vector<32x2xf32>
    %17 = arith.mulf %1, %16 : vector<32x2xf32>
    %cst_15 = arith.constant dense<0.000000e+00> : vector<2xf32>
    %18 = vector.multi_reduction <add>, %17, %cst_15 [0] : vector<32x2xf32> to vector<2xf32>
    %19 = vector.shape_cast %18 : vector<2xf32> to vector<1x2xf32>
    %cst_16 = arith.constant 0.000000e+00 : f32
    %20 = vector.broadcast %cst_16 : f32 to vector<1x2xf32>
    %21 = arith.maximumf %19, %20 : vector<1x2xf32>
    %22 = vector.broadcast %15 : vector<32x1xf32> to vector<32x2xf32>
    %23 = arith.mulf %1, %22 : vector<32x2xf32>
    %cst_17 = arith.constant dense<0.000000e+00> : vector<2xf32>
    %24 = vector.multi_reduction <add>, %23, %cst_17 [0] : vector<32x2xf32> to vector<2xf32>
    %25 = vector.shape_cast %24 : vector<2xf32> to vector<1x2xf32>
    %cst_18 = arith.constant 0.000000e+00 : f32
    %26 = vector.broadcast %cst_18 : f32 to vector<1x2xf32>
    %27 = arith.maximumf %25, %26 : vector<1x2xf32>
    %28 = arith.addf %21, %27 : vector<1x2xf32>
    %29 = vector.broadcast %28 : vector<1x2xf32> to vector<32x2xf32>
    %30 = arith.mulf %3, %29 : vector<32x2xf32>
    %cst_19 = arith.constant dense<0.000000e+00> : vector<32xf32>
    %31 = vector.multi_reduction <add>, %30, %cst_19 [1] : vector<32x2xf32> to vector<32xf32>
    %32 = vector.shape_cast %31 : vector<32xf32> to vector<32x1xf32>
    %33 = arith.negf %32 : vector<32x1xf32>
    %34 = math.exp %33 : vector<32x1xf32>
    %cst_20 = arith.constant 1.000000e+00 : f32
    %35 = vector.broadcast %cst_20 : f32 to vector<32x1xf32>
    %36 = arith.addf %35, %34 : vector<32x1xf32>
    %37 = arith.divf %35, %36 : vector<32x1xf32>
    %38 = vector.broadcast %37 : vector<32x1xf32> to vector<32x256xf32>
    %39 = arith.mulf %9, %38 : vector<32x256xf32>
    %cst_21 = arith.constant dense<0.000000e+00> : vector<256xf32>
    %40 = vector.multi_reduction <add>, %39, %cst_21 [0] : vector<32x256xf32> to vector<256xf32>
    %41 = vector.shape_cast %40 : vector<256xf32> to vector<1x256xf32>
    %cst_22 = arith.constant 3.200000e+01 : f32
    %42 = vector.broadcast %cst_22 : f32 to vector<1x256xf32>
    %43 = arith.divf %41, %42 : vector<1x256xf32>
    %cst_23 = arith.constant dense<0xFF800000> : vector<256xf32>
    %44 = vector.multi_reduction <maximumf>, %39, %cst_23 [0] : vector<32x256xf32> to vector<256xf32>
    %45 = vector.shape_cast %44 : vector<256xf32> to vector<1x256xf32>
    %cst_24 = arith.constant dense<0.000000e+00> : vector<1x256xf32>
    %46 = tpu.matmul %43, %5, %cst_24 {dimension_numbers = #tpu.dot_dimension_numbers<[1], [0], [0], [1], [0, 0, 1, 1], [], []>} : vector<1x256xf32>, vector<256x256xf32>, vector<1x256xf32> -> vector<1x256xf32>
    %cst_25 = arith.constant dense<0.000000e+00> : vector<1x256xf32>
    %47 = tpu.matmul %45, %7, %cst_25 {dimension_numbers = #tpu.dot_dimension_numbers<[1], [0], [0], [1], [0, 0, 1, 1], [], []>} : vector<1x256xf32>, vector<256x256xf32>, vector<1x256xf32> -> vector<1x256xf32>
    %48 = arith.addf %46, %47 : vector<1x256xf32>
    %49 = arith.negf %48 : vector<1x256xf32>
    %50 = math.exp %49 : vector<1x256xf32>
    %cst_26 = arith.constant 1.000000e+00 : f32
    %51 = vector.broadcast %cst_26 : f32 to vector<1x256xf32>
    %52 = arith.addf %51, %50 : vector<1x256xf32>
    %53 = arith.divf %51, %52 : vector<1x256xf32>
    %54 = vector.broadcast %53 : vector<1x256xf32> to vector<32x256xf32>
    %55 = arith.mulf %39, %54 : vector<32x256xf32>
    %c0_27 = arith.constant 0 : index
    %c0_28 = arith.constant 0 : index
    %c0_29 = arith.constant 0 : index
    %56 = vector.load %arg4[%c0_27, %c0_28, %c0_29] : memref<2x32x256xf32, #tpu.memory_space<vmem>>, vector<1x32x256xf32>
    %57 = vector.shape_cast %56 : vector<1x32x256xf32> to vector<32x256xf32>
    %58 = vector.shape_cast %55 : vector<32x256xf32> to vector<1x32x256xf32>
    tpu.vector_store %arg4[%c0_27, %c0_28, %c0_29], %58 {strides = array<i32>} : memref<2x32x256xf32, #tpu.memory_space<vmem>>, vector<1x32x256xf32>,
    %c1_30 = arith.constant 1 : index
    %c0_31 = arith.constant 0 : index
    %c0_32 = arith.constant 0 : index
    %59 = vector.load %arg1[%c1_30, %c0_31, %c0_32] : memref<2x32x256xf32, #tpu.memory_space<vmem>>, vector<1x32x256xf32>
    %60 = vector.shape_cast %59 : vector<1x32x256xf32> to vector<32x256xf32>
    %cst_33 = arith.constant dense<0.000000e+00> : vector<32xf32>
    %61 = vector.multi_reduction <add>, %60, %cst_33 [1] : vector<32x256xf32> to vector<32xf32>
    %62 = vector.shape_cast %61 : vector<32xf32> to vector<32x1xf32>
    %cst_34 = arith.constant 2.560000e+02 : f32
    %63 = vector.broadcast %cst_34 : f32 to vector<32x1xf32>
    %64 = arith.divf %62, %63 : vector<32x1xf32>
    %cst_35 = arith.constant dense<0xFF800000> : vector<32xf32>
    %65 = vector.multi_reduction <maximumf>, %60, %cst_35 [1] : vector<32x256xf32> to vector<32xf32>
    %66 = vector.shape_cast %65 : vector<32xf32> to vector<32x1xf32>
    %67 = vector.broadcast %64 : vector<32x1xf32> to vector<32x2xf32>
    %68 = arith.mulf %1, %67 : vector<32x2xf32>
    %cst_36 = arith.constant dense<0.000000e+00> : vector<2xf32>
    %69 = vector.multi_reduction <add>, %68, %cst_36 [0] : vector<32x2xf32> to vector<2xf32>
    %70 = vector.shape_cast %69 : vector<2xf32> to vector<1x2xf32>
    %cst_37 = arith.constant 0.000000e+00 : f32
    %71 = vector.broadcast %cst_37 : f32 to vector<1x2xf32>
    %72 = arith.maximumf %70, %71 : vector<1x2xf32>
    %73 = vector.broadcast %66 : vector<32x1xf32> to vector<32x2xf32>
    %74 = arith.mulf %1, %73 : vector<32x2xf32>
    %cst_38 = arith.constant dense<0.000000e+00> : vector<2xf32>
    %75 = vector.multi_reduction <add>, %74, %cst_38 [0] : vector<32x2xf32> to vector<2xf32>
    %76 = vector.shape_cast %75 : vector<2xf32> to vector<1x2xf32>
    %cst_39 = arith.constant 0.000000e+00 : f32
    %77 = vector.broadcast %cst_39 : f32 to vector<1x2xf32>
    %78 = arith.maximumf %76, %77 : vector<1x2xf32>
    %79 = arith.addf %72, %78 : vector<1x2xf32>
    %80 = vector.broadcast %79 : vector<1x2xf32> to vector<32x2xf32>
    %81 = arith.mulf %3, %80 : vector<32x2xf32>
    %cst_40 = arith.constant dense<0.000000e+00> : vector<32xf32>
    %82 = vector.multi_reduction <add>, %81, %cst_40 [1] : vector<32x2xf32> to vector<32xf32>
    %83 = vector.shape_cast %82 : vector<32xf32> to vector<32x1xf32>
    %84 = arith.negf %83 : vector<32x1xf32>
    %85 = math.exp %84 : vector<32x1xf32>
    %cst_41 = arith.constant 1.000000e+00 : f32
    %86 = vector.broadcast %cst_41 : f32 to vector<32x1xf32>
    %87 = arith.addf %86, %85 : vector<32x1xf32>
    %88 = arith.divf %86, %87 : vector<32x1xf32>
    %89 = vector.broadcast %88 : vector<32x1xf32> to vector<32x256xf32>
    %90 = arith.mulf %60, %89 : vector<32x256xf32>
    %cst_42 = arith.constant dense<0.000000e+00> : vector<256xf32>
    %91 = vector.multi_reduction <add>, %90, %cst_42 [0] : vector<32x256xf32> to vector<256xf32>
    %92 = vector.shape_cast %91 : vector<256xf32> to vector<1x256xf32>
    %cst_43 = arith.constant 3.200000e+01 : f32
    %93 = vector.broadcast %cst_43 : f32 to vector<1x256xf32>
    %94 = arith.divf %92, %93 : vector<1x256xf32>
    %cst_44 = arith.constant dense<0xFF800000> : vector<256xf32>
    %95 = vector.multi_reduction <maximumf>, %90, %cst_44 [0] : vector<32x256xf32> to vector<256xf32>
    %96 = vector.shape_cast %95 : vector<256xf32> to vector<1x256xf32>
    %cst_45 = arith.constant dense<0.000000e+00> : vector<1x256xf32>
    %97 = tpu.matmul %94, %5, %cst_45 {dimension_numbers = #tpu.dot_dimension_numbers<[1], [0], [0], [1], [0, 0, 1, 1], [], []>} : vector<1x256xf32>, vector<256x256xf32>, vector<1x256xf32> -> vector<1x256xf32>
    %cst_46 = arith.constant dense<0.000000e+00> : vector<1x256xf32>
    %98 = tpu.matmul %96, %7, %cst_46 {dimension_numbers = #tpu.dot_dimension_numbers<[1], [0], [0], [1], [0, 0, 1, 1], [], []>} : vector<1x256xf32>, vector<256x256xf32>, vector<1x256xf32> -> vector<1x256xf32>
    %99 = arith.addf %97, %98 : vector<1x256xf32>
    %100 = arith.negf %99 : vector<1x256xf32>
    %101 = math.exp %100 : vector<1x256xf32>
    %cst_47 = arith.constant 1.000000e+00 : f32
    %102 = vector.broadcast %cst_47 : f32 to vector<1x256xf32>
    %103 = arith.addf %102, %101 : vector<1x256xf32>
    %104 = arith.divf %102, %103 : vector<1x256xf32>
    %105 = vector.broadcast %104 : vector<1x256xf32> to vector<32x256xf32>
    %106 = arith.mulf %90, %105 : vector<32x256xf32>
    %c1_48 = arith.constant 1 : index
    %c0_49 = arith.constant 0 : index
    %c0_50 = arith.constant 0 : index
    %107 = vector.load %arg4[%c1_48, %c0_49, %c0_50] : memref<2x32x256xf32, #tpu.memory_space<vmem>>, vector<1x32x256xf32>
    %108 = vector.shape_cast %107 : vector<1x32x256xf32> to vector<32x256xf32>
    %109 = vector.shape_cast %106 : vector<32x256xf32> to vector<1x32x256xf32>
    tpu.vector_store %arg4[%c1_48, %c0_49, %c0_50], %109 {strides = array<i32>} : memref<2x32x256xf32, #tpu.memory_space<vmem>>, vector<1x32x256xf32>,
    return
  }
  func.func @transform_0(%arg0: i32) -> (i32, i32, i32) {
    %c0_i32 = arith.constant 0 : i32
    %c0_i32_0 = arith.constant 0 : i32
    %c0_i32_1 = arith.constant 0 : i32
    %c0_i32_2 = arith.constant 0 : i32
    return %c0_i32, %c0_i32_0, %c0_i32_1 : i32, i32, i32
  }
  func.func @transform_1(%arg0: i32) -> (i32, i32, i32) {
    %c0_i32 = arith.constant 0 : i32
    %c0_i32_0 = arith.constant 0 : i32
    %c0_i32_1 = arith.constant 0 : i32
    %c0_i32_2 = arith.constant 0 : i32
    return %c0_i32, %c0_i32_0, %c0_i32_1 : i32, i32, i32
  }
  func.func @transform_2(%arg0: i32) -> (i32, i32, i32) {
    %c0_i32 = arith.constant 0 : i32
    %c0_i32_0 = arith.constant 0 : i32
    %c0_i32_1 = arith.constant 0 : i32
    %c0_i32_2 = arith.constant 0 : i32
    return %c0_i32, %c0_i32_0, %c0_i32_1 : i32, i32, i32
  }
  func.func @transform_3(%arg0: i32) -> (i32, i32, i32) {
    %c0_i32 = arith.constant 0 : i32
    %c0_i32_0 = arith.constant 0 : i32
    %c0_i32_1 = arith.constant 0 : i32
    %c0_i32_2 = arith.constant 0 : i32
    return %c0_i32, %c0_i32_0, %c0_i32_1 : i32, i32, i32
  }
}

</mosaic_0001>

<llo_original>
// kernel: tpu_custom_call.1
$region0: #{tpu_custom_call.1}
  #allocation0 [shape = 'u32[]', space=smem, size = 0x4, offset = 0x4, fixed_abs, tag = 'smem constant byte address 0x4 - core index']
  #allocation1 [shape = 'u32[144,128]{1,0:T(1,128)}', space=vmem, size = 0x12000, scoped, tag = 'internal scratch']
  %s0 = inlined_call_operand.hbm [shape: f32[2,32,256], index: 0, kind: input, shape index: {}]
  %s1 = inlined_call_operand.vmem [shape: f32[2,32,2], index: 1, kind: input, shape index: {}]
  %s2 = inlined_call_operand.hbm [shape: f32[2,256,256], index: 2, kind: input, shape index: {}]
  %s3 = inlined_call_operand.hbm [shape: f32[2,32,256], index: 3, kind: output, shape index: {}]
  %s4 = sld [smem:[#allocation0]]
  $region30: #{tpu_custom_call.1} parent=0
    _
  %s6 = ssub.s32 1, %s4
  %s7 = scalar_select 0, %s6, %s4
  $region1: #{tpu_custom_call.1} parent=0
    #allocation2 [shape = 'u8[65536]{0}', space=vmem, size = 0x10000, scoped, tag = 'input window, operand 0, single buffered']
    #allocation3 [shape = 's32[1]{0}', space=sflag, size = 0x4, scoped, tag = 'scoped memory for tpu_custom_call.1']
    #allocation4 [shape = 's32[1]{0}', space=sflag, size = 0x4, scoped, tag = 'scoped memory for tpu_custom_call.1']
    #allocation5 [shape = 'u8[524288]{0}', space=vmem, size = 0x80000, scoped, tag = 'input window, operand 2, single buffered']
    #allocation6 [shape = 's32[1]{0}', space=sflag, size = 0x4, scoped, tag = 'scoped memory for tpu_custom_call.1']
    #allocation7 [shape = 'u8[65536]{0}', space=vmem, size = 0x10000, scoped, tag = 'output window, operand 0, single buffered']
    %8 = vsyncpa [#allocation3], 0
    %9 = vsyncpa [#allocation6], 0
    %10 = vsyncpa [#allocation4], 0
    // Predicated region
    $region2: #{tpu_custom_call.1} parent=1 // pred_check
      _
    $region3: #{tpu_custom_call.1} parent=1 // pred_check_branch
      %12 = sbr.rel (0) target = $region5
    $region4: #{tpu_custom_call.1} parent=1 // pred_region
      %s14 = ssub.s32 2048, 2048
      %15 = vsyncadd [#allocation3], %s14
      %s16 = sshll.u32 [#allocation2], 4
      %s17 = int_to_ptr.vmem [resolvable:$true] %s16
      %22 = dma.hbm_to_vmem [thread:$0]  %s0, 2048, %s17, [#allocation3], 256, 256, 16
    $region5: #{tpu_custom_call.1} parent=1 // pred_fallthru
      _
    // Predicated region
    $region6: #{tpu_custom_call.1} parent=1 // pred_check
      _
    $region7: #{tpu_custom_call.1} parent=1 // pred_check_branch
      %24 = sbr.rel (0) target = $region9
    $region8: #{tpu_custom_call.1} parent=1 // pred_region
      _
    $region9: #{tpu_custom_call.1} parent=1 // pred_fallthru
      _
    // Predicated region
    $region10: #{tpu_custom_call.1} parent=1 // pred_check
      _
    $region11: #{tpu_custom_call.1} parent=1 // pred_check_branch
      %26 = sbr.rel (0) target = $region13
    $region12: #{tpu_custom_call.1} parent=1 // pred_region
      %s28 = ssub.s32 16384, 16384
      %29 = vsyncadd [#allocation6], %s28
      %s30 = sshll.u32 [#allocation5], 4
      %s31 = int_to_ptr.vmem [resolvable:$true] %s30
      %36 = dma.hbm_to_vmem [thread:$0]  %s2, 16384, %s31, [#allocation6], 256, 256, 16
    $region13: #{tpu_custom_call.1} parent=1 // pred_fallthru
      _
    // Predicated region
    $region14: #{tpu_custom_call.1} parent=1 // pred_check
      _
    $region15: #{tpu_custom_call.1} parent=1 // pred_check_branch
      %38 = sbr.rel (0) target = $region17
    $region16: #{tpu_custom_call.1} parent=1 // pred_region
      %39 = dma.done [#allocation3], 2048
    $region17: #{tpu_custom_call.1} parent=1 // pred_fallthru
      _
    // Predicated region
    $region18: #{tpu_custom_call.1} parent=1 // pred_check
      _
    $region19: #{tpu_custom_call.1} parent=1 // pred_check_branch
      %41 = sbr.rel (0) target = $region21
    $region20: #{tpu_custom_call.1} parent=1 // pred_region
      %42 = dma.done [#allocation6], 16384
    $region21: #{tpu_custom_call.1} parent=1 // pred_fallthru
      _
    %v43 = vld [vmem:[%s1] sm:$0xff]
    %v44 = vld [vmem:[%s1 + $0x8] sm:$0xff]
    %v45 = vld [vmem:[%s1 + $0x10] sm:$0xff]
    %v46 = vld [vmem:[%s1 + $0x18] sm:$0xff]
    %s47 = scalar_lea.vmem %s1, 32
    %v48 = vld [vmem:[%s47] sm:$0xff]
    %v49 = vld [vmem:[%s47 + $0x8] sm:$0xff]
    %v50 = vld [vmem:[%s47 + $0x10] sm:$0xff]
    %v51 = vld [vmem:[%s47 + $0x18] sm:$0xff]
    %v52 = vld [vmem:[#allocation5] sm:$0xff]
    %v53 = vld [vmem:[#allocation5 + $0x8] sm:$0xff]
    %v54 = vld [vmem:[#allocation5 + $0x10] sm:$0xff]
    %v55 = vld [vmem:[#allocation5 + $0x18] sm:$0xff]
    %v56 = vld [vmem:[#allocation5 + $0x20] sm:$0xff]
    %v57 = vld [vmem:[#allocation5 + $0x28] sm:$0xff]
    %v58 = vld [vmem:[#allocation5 + $0x30] sm:$0xff]
    %v59 = vld [vmem:[#allocation5 + $0x38] sm:$0xff]
    %v60 = vld [vmem:[#allocation5 + $0x40] sm:$0xff]
    %v61 = vld [vmem:[#allocation5 + $0x48] sm:$0xff]
    %v62 = vld [vmem:[#allocation5 + $0x50] sm:$0xff]
    %v63 = vld [vmem:[#allocation5 + $0x58] sm:$0xff]
    %v64 = vld [vmem:[#allocation5 + $0x60] sm:$0xff]
    %v65 = vld [vmem:[#allocation5 + $0x68] sm:$0xff]
    %v66 = vld [vmem:[#allocation5 + $0x70] sm:$0xff]
    %v67 = vld [vmem:[#allocation5 + $0x78] sm:$0xff]
    %v68 = vld [vmem:[#allocation5 + $0x80] sm:$0xff]
    %v69 = vld [vmem:[#allocation5 + $0x88] sm:$0xff]
    %v70 = vld [vmem:[#allocation5 + $0x90] sm:$0xff]
    %v71 = vld [vmem:[#allocation5 + $0x98] sm:$0xff]
    %v72 = vld [vmem:[#allocation5 + $0xa0] sm:$0xff]
    %v73 = vld [vmem:[#allocation5 + $0xa8] sm:$0xff]
    %v74 = vld [vmem:[#allocation5 + $0xb0] sm:$0xff]
    %v75 = vld [vmem:[#allocation5 + $0xb8] sm:$0xff]
    %v76 = vld [vmem:[#allocation5 + $0xc0] sm:$0xff]
    %v77 = vld [vmem:[#allocation5 + $0xc8] sm:$0xff]
    %v78 = vld [vmem:[#allocation5 + $0xd0] sm:$0xff]
    %v79 = vld [vmem:[#allocation5 + $0xd8] sm:$0xff]
    %v80 = vld [vmem:[#allocation5 + $0xe0] sm:$0xff]
    %v81 = vld [vmem:[#allocation5 + $0xe8] sm:$0xff]
    %v82 = vld [vmem:[#allocation5 + $0xf0] sm:$0xff]
    %v83 = vld [vmem:[#allocation5 + $0xf8] sm:$0xff]
    %v84 = vld [vmem:[#allocation5 + $0x100] sm:$0xff]
    %v85 = vld [vmem:[#allocation5 + $0x108] sm:$0xff]
    %v86 = vld [vmem:[#allocation5 + $0x110] sm:$0xff]
    %v87 = vld [vmem:[#allocation5 + $0x118] sm:$0xff]
    %v88 = vld [vmem:[#allocation5 + $0x120] sm:$0xff]
    %v89 = vld [vmem:[#allocation5 + $0x128] sm:$0xff]
    %v90 = vld [vmem:[#allocation5 + $0x130] sm:$0xff]
    %v91 = vld [vmem:[#allocation5 + $0x138] sm:$0xff]
    %v92 = vld [vmem:[#allocation5 + $0x140] sm:$0xff]
    %v93 = vld [vmem:[#allocation5 + $0x148] sm:$0xff]
    %v94 = vld [vmem:[#allocation5 + $0x150] sm:$0xff]
    %v95 = vld [vmem:[#allocation5 + $0x158] sm:$0xff]
    %v96 = vld [vmem:[#allocation5 + $0x160] sm:$0xff]
    %v97 = vld [vmem:[#allocation5 + $0x168] sm:$0xff]
    %v98 = vld [vmem:[#allocation5 + $0x170] sm:$0xff]
    %v99 = vld [vmem:[#allocation5 + $0x178] sm:$0xff]
    %v100 = vld [vmem:[#allocation5 + $0x180] sm:$0xff]
    %v101 = vld [vmem:[#allocation5 + $0x188] sm:$0xff]
    %v102 = vld [vmem:[#allocation5 + $0x190] sm:$0xff]
    %v103 = vld [vmem:[#allocation5 + $0x198] sm:$0xff]
    %v104 = vld [vmem:[#allocation5 + $0x1a0] sm:$0xff]
    %v105 = vld [vmem:[#allocation5 + $0x1a8] sm:$0xff]
    %v106 = vld [vmem:[#allocation5 + $0x1b0] sm:$0xff]
    %v107 = vld [vmem:[#allocation5 + $0x1b8] sm:$0xff]
    %v108 = vld [vmem:[#allocation5 + $0x1c0] sm:$0xff]
    %v109 = vld [vmem:[#allocation5 + $0x1c8] sm:$0xff]
    %v110 = vld [vmem:[#allocation5 + $0x1d0] sm:$0xff]
    %v111 = vld [vmem:[#allocation5 + $0x1d8] sm:$0xff]
    %v112 = vld [vmem:[#allocation5 + $0x1e0] sm:$0xff]
    %v113 = vld [vmem:[#allocation5 + $0x1e8] sm:$0xff]
    %v114 = vld [vmem:[#allocation5 + $0x1f0] sm:$0xff]
    %v115 = vld [vmem:[#allocation5 + $0x1f8] sm:$0xff]
    %s116 = scalar_lea.vmem [#allocation5], 512
    %v117 = vld [vmem:[%s116] sm:$0xff]
    %v118 = vld [vmem:[%s116 + $0x8] sm:$0xff]
    %v119 = vld [vmem:[%s116 + $0x10] sm:$0xff]
    %v120 = vld [vmem:[%s116 + $0x18] sm:$0xff]
    %v121 = vld [vmem:[%s116 + $0x20] sm:$0xff]
    %v122 = vld [vmem:[%s116 + $0x28] sm:$0xff]
    %v123 = vld [vmem:[%s116 + $0x30] sm:$0xff]
    %v124 = vld [vmem:[%s116 + $0x38] sm:$0xff]
    %v125 = vld [vmem:[%s116 + $0x40] sm:$0xff]
    %v126 = vld [vmem:[%s116 + $0x48] sm:$0xff]
    %v127 = vld [vmem:[%s116 + $0x50] sm:$0xff]
    %v128 = vld [vmem:[%s116 + $0x58] sm:$0xff]
    %v129 = vld [vmem:[%s116 + $0x60] sm:$0xff]
    %v130 = vld [vmem:[%s116 + $0x68] sm:$0xff]
    %v131 = vld [vmem:[%s116 + $0x70] sm:$0xff]
    %v132 = vld [vmem:[%s116 + $0x78] sm:$0xff]
    %v133 = vld [vmem:[%s116 + $0x80] sm:$0xff]
    %v134 = vld [vmem:[%s116 + $0x88] sm:$0xff]
    %v135 = vld [vmem:[%s116 + $0x90] sm:$0xff]
    %v136 = vld [vmem:[%s116 + $0x98] sm:$0xff]
    %v137 = vld [vmem:[%s116 + $0xa0] sm:$0xff]
    %v138 = vld [vmem:[%s116 + $0xa8] sm:$0xff]
    %v139 = vld [vmem:[%s116 + $0xb0] sm:$0xff]
    %v140 = vld [vmem:[%s116 + $0xb8] sm:$0xff]
    %v141 = vld [vmem:[%s116 + $0xc0] sm:$0xff]
    %v142 = vld [vmem:[%s116 + $0xc8] sm:$0xff]
    %v143 = vld [vmem:[%s116 + $0xd0] sm:$0xff]
    %v144 = vld [vmem:[%s116 + $0xd8] sm:$0xff]
    %v145 = vld [vmem:[%s116 + $0xe0] sm:$0xff]
    %v146 = vld [vmem:[%s116 + $0xe8] sm:$0xff]
    %v147 = vld [vmem:[%s116 + $0xf0] sm:$0xff]
    %v148 = vld [vmem:[%s116 + $0xf8] sm:$0xff]
    %v149 = vld [vmem:[%s116 + $0x100] sm:$0xff]
    %v150 = vld [vmem:[%s116 + $0x108] sm:$0xff]
    %v151 = vld [vmem:[%s116 + $0x110] sm:$0xff]
    %v152 = vld [vmem:[%s116 + $0x118] sm:$0xff]
    %v153 = vld [vmem:[%s116 + $0x120] sm:$0xff]
    %v154 = vld [vmem:[%s116 + $0x128] sm:$0xff]
    %v155 = vld [vmem:[%s116 + $0x130] sm:$0xff]
    %v156 = vld [vmem:[%s116 + $0x138] sm:$0xff]
    %v157 = vld [vmem:[%s116 + $0x140] sm:$0xff]
    %v158 = vld [vmem:[%s116 + $0x148] sm:$0xff]
    %v159 = vld [vmem:[%s116 + $0x150] sm:$0xff]
    %v160 = vld [vmem:[%s116 + $0x158] sm:$0xff]
    %v161 = vld [vmem:[%s116 + $0x160] sm:$0xff]
    %v162 = vld [vmem:[%s116 + $0x168] sm:$0xff]
    %v163 = vld [vmem:[%s116 + $0x170] sm:$0xff]
    %v164 = vld [vmem:[%s116 + $0x178] sm:$0xff]
    %v165 = vld [vmem:[%s116 + $0x180] sm:$0xff]
    %v166 = vld [vmem:[%s116 + $0x188] sm:$0xff]
    %v167 = vld [vmem:[%s116 + $0x190] sm:$0xff]
    %v168 = vld [vmem:[%s116 + $0x198] sm:$0xff]
    %v169 = vld [vmem:[%s116 + $0x1a0] sm:$0xff]
    %v170 = vld [vmem:[%s116 + $0x1a8] sm:$0xff]
    %v171 = vld [vmem:[%s116 + $0x1b0] sm:$0xff]
    %v172 = vld [vmem:[%s116 + $0x1b8] sm:$0xff]
    %v173 = vld [vmem:[%s116 + $0x1c0] sm:$0xff]
    %v174 = vld [vmem:[%s116 + $0x1c8] sm:$0xff]
    %v175 = vld [vmem:[%s116 + $0x1d0] sm:$0xff]
    %v176 = vld [vmem:[%s116 + $0x1d8] sm:$0xff]
    %v177 = vld [vmem:[%s116 + $0x1e0] sm:$0xff]
    %v178 = vld [vmem:[%s116 + $0x1e8] sm:$0xff]
    %v179 = vld [vmem:[%s116 + $0x1f0] sm:$0xff]
    %v180 = vld [vmem:[%s116 + $0x1f8] sm:$0xff]
    %v181 = vld [vmem:[#allocation2] sm:$0xff]
    %v182 = vld [vmem:[#allocation2 + $0x8] sm:$0xff]
    %v183 = vld [vmem:[#allocation2 + $0x10] sm:$0xff]
    %v184 = vld [vmem:[#allocation2 + $0x18] sm:$0xff]
    %v185 = vld [vmem:[#allocation2 + $0x20] sm:$0xff]
    %v186 = vld [vmem:[#allocation2 + $0x28] sm:$0xff]
    %v187 = vld [vmem:[#allocation2 + $0x30] sm:$0xff]
    %v188 = vld [vmem:[#allocation2 + $0x38] sm:$0xff]
    %v189 = vadd.f32 %v181, %v182
    %190 = vadd.xlane.f32.xlu0 %v189
    %v191 = vpop.xlane.xlu0 %190
    %v192 = vadd.f32 %v183, %v184
    %193 = vadd.xlane.f32.xlu0 %v192
    %v194 = vpop.xlane.xlu0 %193
    %v195 = vadd.f32 %v185, %v186
    %196 = vadd.xlane.f32.xlu0 %v195
    %v197 = vpop.xlane.xlu0 %196
    %v198 = vadd.f32 %v187, %v188
    %199 = vadd.xlane.f32.xlu0 %v198
    %v200 = vpop.xlane.xlu0 %199
    %v201 = vrcp.pop 256.0
    %v202 = vmul.f32 %v191, %v201
    %v203 = vmul.f32 %v194, %v201
    %v204 = vmul.f32 %v197, %v201
    %v205 = vmul.f32 %v200, %v201
    %v206 = vmax.f32 %v181, %v182
    %207 = vmax.xlane.f32.xlu0 %v206
    %v208 = vpop.xlane.xlu0 %207
    %v209 = vmax.f32 %v183, %v184
    %210 = vmax.xlane.f32.xlu0 %v209
    %v211 = vpop.xlane.xlu0 %210
    %v212 = vmax.f32 %v185, %v186
    %213 = vmax.xlane.f32.xlu0 %v212
    %v214 = vpop.xlane.xlu0 %213
    %v215 = vmax.f32 %v187, %v188
    %216 = vmax.xlane.f32.xlu0 %v215
    %v217 = vpop.xlane.xlu0 %216
    %v218 = vmul.f32 %v43, %v202
    %v219 = vmul.f32 %v44, %v203
    %v220 = vmul.f32 %v45, %v204
    %v221 = vmul.f32 %v46, %v205
    %vm222 = vcmask 15360
    %v223 = vsel %vm222, %v218, 0.0
    %v224 = vsel %vm222, %v219, 0.0
    %v225 = vadd.f32 %v223, %v224
    %v226 = vsel %vm222, %v220, 0.0
    %v227 = vadd.f32 %v225, %v226
    %v228 = vsel %vm222, %v221, 0.0
    %v229 = vadd.f32 %v227, %v228
    %v230 = vrot.slane %v229, 4
    %v231 = vadd.f32 %v229, %v230
    %v232 = vrot.slane %v231, 2
    %v233 = vadd.f32 %v231, %v232
    %v234 = vrot.slane %v233, 1
    %v235 = vadd.f32 %v233, %v234
    %v236 = vmax.f32 %v235, 0.0
    %v237 = vmul.f32 %v43, %v208
    %v238 = vmul.f32 %v44, %v211
    %v239 = vmul.f32 %v45, %v214
    %v240 = vmul.f32 %v46, %v217
    %v241 = vsel %vm222, %v237, 0.0
    %v242 = vsel %vm222, %v238, 0.0
    %v243 = vadd.f32 %v241, %v242
    %v244 = vsel %vm222, %v239, 0.0
    %v245 = vadd.f32 %v243, %v244
    %v246 = vsel %vm222, %v240, 0.0
    %v247 = vadd.f32 %v245, %v246
    %v248 = vrot.slane %v247, 4
    %v249 = vadd.f32 %v247, %v248
    %v250 = vrot.slane %v249, 2
    %v251 = vadd.f32 %v249, %v250
    %v252 = vrot.slane %v251, 1
    %v253 = vadd.f32 %v251, %v252
    %v254 = vmax.f32 %v253, 0.0
    %v255 = vadd.f32 %v236, %v254
    %v256 = vmul.f32 %v48, %v255
    %v257 = vmul.f32 %v49, %v255
    %v258 = vmul.f32 %v50, %v255
    %v259 = vmul.f32 %v51, %v255
    %v260 = vsel %vm222, %v256, 0.0
    %261 = vadd.xlane.f32.xlu0 %v260
    %v262 = vpop.xlane.xlu0 %261
    %v263 = vsel %vm222, %v257, 0.0
    %264 = vadd.xlane.f32.xlu0 %v263
    %v265 = vpop.xlane.xlu0 %264
    %v266 = vsel %vm222, %v258, 0.0
    %267 = vadd.xlane.f32.xlu0 %v266
    %v268 = vpop.xlane.xlu0 %267
    %v269 = vsel %vm222, %v259, 0.0
    %270 = vadd.xlane.f32.xlu0 %v269
    %v271 = vpop.xlane.xlu0 %270
    %v272 = vxor.u32 %v262, 2147483648
    %v273 = vxor.u32 %v265, 2147483648
    %v274 = vxor.u32 %v268, 2147483648
    %v275 = vxor.u32 %v271, 2147483648
    %v276 = vmul.f32 %v272, 1.442695
    %v277 = vpow.pop %v276
    %v278 = vmul.f32 %v273, 1.442695
    %v279 = vpow.pop %v278
    %v280 = vmul.f32 %v274, 1.442695
    %v281 = vpow.pop %v280
    %v282 = vmul.f32 %v275, 1.442695
    %v283 = vpow.pop %v282
    %v284 = vadd.f32 %v277, 1.0
    %v285 = vadd.f32 %v279, 1.0
    %v286 = vadd.f32 %v281, 1.0
    %v287 = vadd.f32 %v283, 1.0
    %v288 = vrcp.pop %v284
    %v289 = vmul.f32 1.0, %v288
    %v290 = vrcp.pop %v285
    %v291 = vmul.f32 1.0, %v290
    %v292 = vrcp.pop %v286
    %v293 = vmul.f32 1.0, %v292
    %v294 = vrcp.pop %v287
    %v295 = vmul.f32 1.0, %v294
    %v296 = vmul.f32 %v181, %v289
    %v297 = vmul.f32 %v182, %v289
    %v298 = vmul.f32 %v183, %v291
    %v299 = vmul.f32 %v184, %v291
    %v300 = vmul.f32 %v185, %v293
    %v301 = vmul.f32 %v186, %v293
    %v302 = vmul.f32 %v187, %v295
    %v303 = vmul.f32 %v188, %v295
    %v304 = vadd.f32 %v296, %v298
    %v305 = vadd.f32 %v304, %v300
    %v306 = vadd.f32 %v305, %v302
    %v307 = vrot.slane %v306, 4
    %v308 = vadd.f32 %v306, %v307
    %v309 = vrot.slane %v308, 2
    %v310 = vadd.f32 %v308, %v309
    %v311 = vrot.slane %v310, 1
    %v312 = vadd.f32 %v310, %v311
    %v313 = vadd.f32 %v297, %v299
    %v314 = vadd.f32 %v313, %v301
    %v315 = vadd.f32 %v314, %v303
    %v316 = vrot.slane %v315, 4
    %v317 = vadd.f32 %v315, %v316
    %v318 = vrot.slane %v317, 2
    %v319 = vadd.f32 %v317, %v318
    %v320 = vrot.slane %v319, 1
    %v321 = vadd.f32 %v319, %v320
    %v322 = vrcp.pop 32.0
    %v323 = vmul.f32 %v312, %v322
    %v324 = vmul.f32 %v321, %v322
    %v325 = vmax.f32 %v296, %v300
    %v326 = vmax.f32 %v298, %v302
    %v327 = vmax.f32 %v325, %v326
    %v328 = vrot.slane %v327, 4
    %v329 = vmax.f32 %v327, %v328
    %v330 = vrot.slane %v329, 2
    %v331 = vmax.f32 %v329, %v330
    %v332 = vrot.slane %v331, 1
    %v333 = vmax.f32 %v331, %v332
    %v334 = vmax.f32 %v297, %v301
    %v335 = vmax.f32 %v299, %v303
    %v336 = vmax.f32 %v334, %v335
    %v337 = vrot.slane %v336, 4
    %v338 = vmax.f32 %v336, %v337
    %v339 = vrot.slane %v338, 2
    %v340 = vmax.f32 %v338, %v339
    %v341 = vrot.slane %v340, 1
    %v342 = vmax.f32 %v340, %v341
    %343 = vmatprep.subr.mxu0 %v118
    %344 = vmatpush1.msra.mxu0 %v117
    %345 = vmatprep.subr.mxu0 %v120
    %346 = vmatpush1.msra.mxu0 %v119
    %347 = vmatprep.subr.mxu0 %v122
    %348 = vmatpush1.msra.mxu0 %v121
    %349 = vmatprep.subr.mxu0 %v124
    %350 = vmatpush1.msra.mxu0 %v123
    %351 = vmatprep.subr.mxu0 %v126
    %352 = vmatpush1.msra.mxu0 %v125
    %353 = vmatprep.subr.mxu0 %v128
    %354 = vmatpush1.msra.mxu0 %v127
    %355 = vmatprep.subr.mxu0 %v130
    %356 = vmatpush1.msra.mxu0 %v129
    %357 = vmatprep.subr.mxu0 %v132
    %358 = vmatpush1.msra.mxu0 %v131
    %359 = vmatprep.subr.mxu0 %v134
    %360 = vmatpush1.msra.mxu0 %v133
    %361 = vmatprep.subr.mxu0 %v136
    %362 = vmatpush1.msra.mxu0 %v135
    %363 = vmatprep.subr.mxu0 %v138
    %364 = vmatpush1.msra.mxu0 %v137
    %365 = vmatprep.subr.mxu0 %v140
    %366 = vmatpush1.msra.mxu0 %v139
    %367 = vmatprep.subr.mxu0 %v142
    %368 = vmatpush1.msra.mxu0 %v141
    %369 = vmatprep.subr.mxu0 %v144
    %370 = vmatpush1.msra.mxu0 %v143
    %371 = vmatprep.subr.mxu0 %v146
    %372 = vmatpush1.msra.mxu0 %v145
    %373 = vmatprep.subr.mxu0 %v148
    %374 = vmatpush1.msra.mxu0 %v147
    %375 = vmatprep.subr.mxu0 %v150
    %376 = vmatpush1.msra.mxu0 %v149
    %377 = vmatprep.subr.mxu0 %v152
    %378 = vmatpush1.msra.mxu0 %v151
    %379 = vmatprep.subr.mxu0 %v154
    %380 = vmatpush1.msra.mxu0 %v153
    %381 = vmatprep.subr.mxu0 %v156
    %382 = vmatpush1.msra.mxu0 %v155
    %383 = vmatprep.subr.mxu0 %v158
    %384 = vmatpush1.msra.mxu0 %v157
    %385 = vmatprep.subr.mxu0 %v160
    %386 = vmatpush1.msra.mxu0 %v159
    %387 = vmatprep.subr.mxu0 %v162
    %388 = vmatpush1.msra.mxu0 %v161
    %389 = vmatprep.subr.mxu0 %v164
    %390 = vmatpush1.msra.mxu0 %v163
    %391 = vmatprep.subr.mxu0 %v166
    %392 = vmatpush1.msra.mxu0 %v165
    %393 = vmatprep.subr.mxu0 %v168
    %394 = vmatpush1.msra.mxu0 %v167
    %395 = vmatprep.subr.mxu0 %v170
    %396 = vmatpush1.msra.mxu0 %v169
    %397 = vmatprep.subr.mxu0 %v172
    %398 = vmatpush1.msra.mxu0 %v171
    %399 = vmatprep.subr.mxu0 %v174
    %400 = vmatpush1.msra.mxu0 %v173
    %401 = vmatprep.subr.mxu0 %v176
    %402 = vmatpush1.msra.mxu0 %v175
    %403 = vmatprep.subr.mxu0 %v178
    %404 = vmatpush1.msra.mxu0 %v177
    %405 = vmatprep.subr.mxu0 %v180
    %406 = vmatpush1.msra.mxu0 %v179
    %407 = vmatprep.mubr.f32.mxu0 %v342
    %408 = vmatmul.mubr.f32.gmra.mrb[0].mxu0 %v333
    %v409 = vpop.f32.mrb[0].mxu0
    %v410 = vadd.f32 0.0, %v409
    %v411 = vpop.f32.mrb[0].mxu0
    %v412 = vadd.f32 0.0, %v411
    %413 = vdwg.mxu0
    %414 = vmatprep.subr.mxu0 %v53
    %415 = vmatpush1.msra.mxu0 %v52
    %416 = vmatprep.subr.mxu0 %v55
    %417 = vmatpush1.msra.mxu0 %v54
    %418 = vmatprep.subr.mxu0 %v57
    %419 = vmatpush1.msra.mxu0 %v56
    %420 = vmatprep.subr.mxu0 %v59
    %421 = vmatpush1.msra.mxu0 %v58
    %422 = vmatprep.subr.mxu0 %v61
    %423 = vmatpush1.msra.mxu0 %v60
    %424 = vmatprep.subr.mxu0 %v63
    %425 = vmatpush1.msra.mxu0 %v62
    %426 = vmatprep.subr.mxu0 %v65
    %427 = vmatpush1.msra.mxu0 %v64
    %428 = vmatprep.subr.mxu0 %v67
    %429 = vmatpush1.msra.mxu0 %v66
    %430 = vmatprep.subr.mxu0 %v69
    %431 = vmatpush1.msra.mxu0 %v68
    %432 = vmatprep.subr.mxu0 %v71
    %433 = vmatpush1.msra.mxu0 %v70
    %434 = vmatprep.subr.mxu0 %v73
    %435 = vmatpush1.msra.mxu0 %v72
    %436 = vmatprep.subr.mxu0 %v75
    %437 = vmatpush1.msra.mxu0 %v74
    %438 = vmatprep.subr.mxu0 %v77
    %439 = vmatpush1.msra.mxu0 %v76
    %440 = vmatprep.subr.mxu0 %v79
    %441 = vmatpush1.msra.mxu0 %v78
    %442 = vmatprep.subr.mxu0 %v81
    %443 = vmatpush1.msra.mxu0 %v80
    %444 = vmatprep.subr.mxu0 %v83
    %445 = vmatpush1.msra.mxu0 %v82
    %446 = vmatprep.subr.mxu0 %v85
    %447 = vmatpush1.msra.mxu0 %v84
    %448 = vmatprep.subr.mxu0 %v87
    %449 = vmatpush1.msra.mxu0 %v86
    %450 = vmatprep.subr.mxu0 %v89
    %451 = vmatpush1.msra.mxu0 %v88
    %452 = vmatprep.subr.mxu0 %v91
    %453 = vmatpush1.msra.mxu0 %v90
    %454 = vmatprep.subr.mxu0 %v93
    %455 = vmatpush1.msra.mxu0 %v92
    %456 = vmatprep.subr.mxu0 %v95
    %457 = vmatpush1.msra.mxu0 %v94
    %458 = vmatprep.subr.mxu0 %v97
    %459 = vmatpush1.msra.mxu0 %v96
    %460 = vmatprep.subr.mxu0 %v99
    %461 = vmatpush1.msra.mxu0 %v98
    %462 = vmatprep.subr.mxu0 %v101
    %463 = vmatpush1.msra.mxu0 %v100
    %464 = vmatprep.subr.mxu0 %v103
    %465 = vmatpush1.msra.mxu0 %v102
    %466 = vmatprep.subr.mxu0 %v105
    %467 = vmatpush1.msra.mxu0 %v104
    %468 = vmatprep.subr.mxu0 %v107
    %469 = vmatpush1.msra.mxu0 %v106
    %470 = vmatprep.subr.mxu0 %v109
    %471 = vmatpush1.msra.mxu0 %v108
    %472 = vmatprep.subr.mxu0 %v111
    %473 = vmatpush1.msra.mxu0 %v110
    %474 = vmatprep.subr.mxu0 %v113
    %475 = vmatpush1.msra.mxu0 %v112
    %476 = vmatprep.subr.mxu0 %v115
    %477 = vmatpush1.msra.mxu0 %v114
    %478 = vmatprep.mubr.f32.mxu0 %v324
    %479 = vmatmul.mubr.f32.gmra.mrb[0].mxu0 %v323
    %v480 = vpop.f32.mrb[0].mxu0
    %v481 = vadd.f32 %v410, %v480
    %v482 = vpop.f32.mrb[0].mxu0
    %v483 = vadd.f32 %v412, %v482
    %484 = vdwg.mxu0
    %v485 = vxor.u32 %v481, 2147483648
    %v486 = vxor.u32 %v483, 2147483648
    %v487 = vmul.f32 %v485, 1.442695
    %v488 = vpow.pop %v487
    %v489 = vmul.f32 %v486, 1.442695
    %v490 = vpow.pop %v489
    %v491 = vadd.f32 %v488, 1.0
    %v492 = vadd.f32 %v490, 1.0
    %v493 = vrcp.pop %v491
    %v494 = vmul.f32 1.0, %v493
    %v495 = vrcp.pop %v492
    %v496 = vmul.f32 1.0, %v495
    %v497 = vlaneseq
    %v498 = vshrl.u32 %v497, 7
    %v499 = vsub.s32 0, %v498
    %v500 = vrot.slane %v494, %v499
    %v501 = vlaneseq
    %v502 = vshrl.u32 %v501, 7
    %v503 = vsub.s32 0, %v502
    %v504 = vrot.slane %v496, %v503
    %v505 = vmul.f32 %v296, %v500
    %v506 = vmul.f32 %v297, %v504
    %v507 = vmul.f32 %v298, %v500
    %v508 = vmul.f32 %v299, %v504
    %v509 = vmul.f32 %v300, %v500
    %v510 = vmul.f32 %v301, %v504
    %v511 = vmul.f32 %v302, %v500
    %v512 = vmul.f32 %v303, %v504
    %513 = vst [vmem:[#allocation7] sm:$0xff] %v505
    %514 = vst [vmem:[#allocation7 + $0x8] sm:$0xff] %v506
    %515 = vst [vmem:[#allocation7 + $0x10] sm:$0xff] %v507
    %516 = vst [vmem:[#allocation7 + $0x18] sm:$0xff] %v508
    %517 = vst [vmem:[#allocation7 + $0x20] sm:$0xff] %v509
    %518 = vst [vmem:[#allocation7 + $0x28] sm:$0xff] %v510
    %519 = vst [vmem:[#allocation7 + $0x30] sm:$0xff] %v511
    %520 = vst [vmem:[#allocation7 + $0x38] sm:$0xff] %v512
    %s521 = scalar_lea.vmem [#allocation2], 64
    %v522 = vld [vmem:[%s521] sm:$0xff]
    %v523 = vld [vmem:[%s521 + $0x8] sm:$0xff]
    %v524 = vld [vmem:[%s521 + $0x10] sm:$0xff]
    %v525 = vld [vmem:[%s521 + $0x18] sm:$0xff]
    %v526 = vld [vmem:[%s521 + $0x20] sm:$0xff]
    %v527 = vld [vmem:[%s521 + $0x28] sm:$0xff]
    %v528 = vld [vmem:[%s521 + $0x30] sm:$0xff]
    %v529 = vld [vmem:[%s521 + $0x38] sm:$0xff]
    %v530 = vadd.f32 %v522, %v523
    %531 = vadd.xlane.f32.xlu0 %v530
    %v532 = vpop.xlane.xlu0 %531
    %v533 = vadd.f32 %v524, %v525
    %534 = vadd.xlane.f32.xlu0 %v533
    %v535 = vpop.xlane.xlu0 %534
    %v536 = vadd.f32 %v526, %v527
    %537 = vadd.xlane.f32.xlu0 %v536
    %v538 = vpop.xlane.xlu0 %537
    %v539 = vadd.f32 %v528, %v529
    %540 = vadd.xlane.f32.xlu0 %v539
    %v541 = vpop.xlane.xlu0 %540
    %v542 = vmul.f32 %v532, %v201
    %v543 = vmul.f32 %v535, %v201
    %v544 = vmul.f32 %v538, %v201
    %v545 = vmul.f32 %v541, %v201
    %v546 = vmax.f32 %v522, %v523
    %547 = vmax.xlane.f32.xlu0 %v546
    %v548 = vpop.xlane.xlu0 %547
    %v549 = vmax.f32 %v524, %v525
    %550 = vmax.xlane.f32.xlu0 %v549
    %v551 = vpop.xlane.xlu0 %550
    %v552 = vmax.f32 %v526, %v527
    %553 = vmax.xlane.f32.xlu0 %v552
    %v554 = vpop.xlane.xlu0 %553
    %v555 = vmax.f32 %v528, %v529
    %556 = vmax.xlane.f32.xlu0 %v555
    %v557 = vpop.xlane.xlu0 %556
    %v558 = vmul.f32 %v43, %v542
    %v559 = vmul.f32 %v44, %v543
    %v560 = vmul.f32 %v45, %v544
    %v561 = vmul.f32 %v46, %v545
    %v562 = vsel %vm222, %v558, 0.0
    %v563 = vsel %vm222, %v559, 0.0
    %v564 = vadd.f32 %v562, %v563
    %v565 = vsel %vm222, %v560, 0.0
    %v566 = vadd.f32 %v564, %v565
    %v567 = vsel %vm222, %v561, 0.0
    %v568 = vadd.f32 %v566, %v567
    %v569 = vrot.slane %v568, 4
    %v570 = vadd.f32 %v568, %v569
    %v571 = vrot.slane %v570, 2
    %v572 = vadd.f32 %v570, %v571
    %v573 = vrot.slane %v572, 1
    %v574 = vadd.f32 %v572, %v573
    %v575 = vmax.f32 %v574, 0.0
    %v576 = vmul.f32 %v43, %v548
    %v577 = vmul.f32 %v44, %v551
    %v578 = vmul.f32 %v45, %v554
    %v579 = vmul.f32 %v46, %v557
    %v580 = vsel %vm222, %v576, 0.0
    %v581 = vsel %vm222, %v577, 0.0
    %v582 = vadd.f32 %v580, %v581
    %v583 = vsel %vm222, %v578, 0.0
    %v584 = vadd.f32 %v582, %v583
    %v585 = vsel %vm222, %v579, 0.0
    %v586 = vadd.f32 %v584, %v585
    %v587 = vrot.slane %v586, 4
    %v588 = vadd.f32 %v586, %v587
    %v589 = vrot.slane %v588, 2
    %v590 = vadd.f32 %v588, %v589
    %v591 = vrot.slane %v590, 1
    %v592 = vadd.f32 %v590, %v591
    %v593 = vmax.f32 %v592, 0.0
    %v594 = vadd.f32 %v575, %v593
    %v595 = vmul.f32 %v48, %v594
    %v596 = vmul.f32 %v49, %v594
    %v597 = vmul.f32 %v50, %v594
    %v598 = vmul.f32 %v51, %v594
    %v599 = vsel %vm222, %v595, 0.0
    %600 = vadd.xlane.f32.xlu0 %v599
    %v601 = vpop.xlane.xlu0 %600
    %v602 = vsel %vm222, %v596, 0.0
    %603 = vadd.xlane.f32.xlu0 %v602
    %v604 = vpop.xlane.xlu0 %603
    %v605 = vsel %vm222, %v597, 0.0
    %606 = vadd.xlane.f32.xlu0 %v605
    %v607 = vpop.xlane.xlu0 %606
    %v608 = vsel %vm222, %v598, 0.0
    %609 = vadd.xlane.f32.xlu0 %v608
    %v610 = vpop.xlane.xlu0 %609
    %v611 = vxor.u32 %v601, 2147483648
    %v612 = vxor.u32 %v604, 2147483648
    %v613 = vxor.u32 %v607, 2147483648
    %v614 = vxor.u32 %v610, 2147483648
    %v615 = vmul.f32 %v611, 1.442695
    %v616 = vpow.pop %v615
    %v617 = vmul.f32 %v612, 1.442695
    %v618 = vpow.pop %v617
    %v619 = vmul.f32 %v613, 1.442695
    %v620 = vpow.pop %v619
    %v621 = vmul.f32 %v614, 1.442695
    %v622 = vpow.pop %v621
    %v623 = vadd.f32 %v616, 1.0
    %v624 = vadd.f32 %v618, 1.0
    %v625 = vadd.f32 %v620, 1.0
    %v626 = vadd.f32 %v622, 1.0
    %v627 = vrcp.pop %v623
    %v628 = vmul.f32 1.0, %v627
    %v629 = vrcp.pop %v624
    %v630 = vmul.f32 1.0, %v629
    %v631 = vrcp.pop %v625
    %v632 = vmul.f32 1.0, %v631
    %v633 = vrcp.pop %v626
    %v634 = vmul.f32 1.0, %v633
    %v635 = vmul.f32 %v522, %v628
    %v636 = vmul.f32 %v523, %v628
    %v637 = vmul.f32 %v524, %v630
    %v638 = vmul.f32 %v525, %v630
    %v639 = vmul.f32 %v526, %v632
    %v640 = vmul.f32 %v527, %v632
    %v641 = vmul.f32 %v528, %v634
    %v642 = vmul.f32 %v529, %v634
    %v643 = vadd.f32 %v635, %v637
    %v644 = vadd.f32 %v643, %v639
    %v645 = vadd.f32 %v644, %v641
    %v646 = vrot.slane %v645, 4
    %v647 = vadd.f32 %v645, %v646
    %v648 = vrot.slane %v647, 2
    %v649 = vadd.f32 %v647, %v648
    %v650 = vrot.slane %v649, 1
    %v651 = vadd.f32 %v649, %v650
    %v652 = vadd.f32 %v636, %v638
    %v653 = vadd.f32 %v652, %v640
    %v654 = vadd.f32 %v653, %v642
    %v655 = vrot.slane %v654, 4
    %v656 = vadd.f32 %v654, %v655
    %v657 = vrot.slane %v656, 2
    %v658 = vadd.f32 %v656, %v657
    %v659 = vrot.slane %v658, 1
    %v660 = vadd.f32 %v658, %v659
    %v661 = vmul.f32 %v651, %v322
    %v662 = vmul.f32 %v660, %v322
    %v663 = vmax.f32 %v635, %v639
    %v664 = vmax.f32 %v637, %v641
    %v665 = vmax.f32 %v663, %v664
    %v666 = vrot.slane %v665, 4
    %v667 = vmax.f32 %v665, %v666
    %v668 = vrot.slane %v667, 2
    %v669 = vmax.f32 %v667, %v668
    %v670 = vrot.slane %v669, 1
    %v671 = vmax.f32 %v669, %v670
    %v672 = vmax.f32 %v636, %v640
    %v673 = vmax.f32 %v638, %v642
    %v674 = vmax.f32 %v672, %v673
    %v675 = vrot.slane %v674, 4
    %v676 = vmax.f32 %v674, %v675
    %v677 = vrot.slane %v676, 2
    %v678 = vmax.f32 %v676, %v677
    %v679 = vrot.slane %v678, 1
    %v680 = vmax.f32 %v678, %v679
    %681 = vmatprep.subr.mxu0 %v118
    %682 = vmatpush1.msra.mxu0 %v117
    %683 = vmatprep.subr.mxu0 %v120
    %684 = vmatpush1.msra.mxu0 %v119
    %685 = vmatprep.subr.mxu0 %v122
    %686 = vmatpush1.msra.mxu0 %v121
    %687 = vmatprep.subr.mxu0 %v124
    %688 = vmatpush1.msra.mxu0 %v123
    %689 = vmatprep.subr.mxu0 %v126
    %690 = vmatpush1.msra.mxu0 %v125
    %691 = vmatprep.subr.mxu0 %v128
    %692 = vmatpush1.msra.mxu0 %v127
    %693 = vmatprep.subr.mxu0 %v130
    %694 = vmatpush1.msra.mxu0 %v129
    %695 = vmatprep.subr.mxu0 %v132
    %696 = vmatpush1.msra.mxu0 %v131
    %697 = vmatprep.subr.mxu0 %v134
    %698 = vmatpush1.msra.mxu0 %v133
    %699 = vmatprep.subr.mxu0 %v136
    %700 = vmatpush1.msra.mxu0 %v135
    %701 = vmatprep.subr.mxu0 %v138
    %702 = vmatpush1.msra.mxu0 %v137
    %703 = vmatprep.subr.mxu0 %v140
    %704 = vmatpush1.msra.mxu0 %v139
    %705 = vmatprep.subr.mxu0 %v142
    %706 = vmatpush1.msra.mxu0 %v141
    %707 = vmatprep.subr.mxu0 %v144
    %708 = vmatpush1.msra.mxu0 %v143
    %709 = vmatprep.subr.mxu0 %v146
    %710 = vmatpush1.msra.mxu0 %v145
    %711 = vmatprep.subr.mxu0 %v148
    %712 = vmatpush1.msra.mxu0 %v147
    %713 = vmatprep.subr.mxu0 %v150
    %714 = vmatpush1.msra.mxu0 %v149
    %715 = vmatprep.subr.mxu0 %v152
    %716 = vmatpush1.msra.mxu0 %v151
    %717 = vmatprep.subr.mxu0 %v154
    %718 = vmatpush1.msra.mxu0 %v153
    %719 = vmatprep.subr.mxu0 %v156
    %720 = vmatpush1.msra.mxu0 %v155
    %721 = vmatprep.subr.mxu0 %v158
    %722 = vmatpush1.msra.mxu0 %v157
    %723 = vmatprep.subr.mxu0 %v160
    %724 = vmatpush1.msra.mxu0 %v159
    %725 = vmatprep.subr.mxu0 %v162
    %726 = vmatpush1.msra.mxu0 %v161
    %727 = vmatprep.subr.mxu0 %v164
    %728 = vmatpush1.msra.mxu0 %v163
    %729 = vmatprep.subr.mxu0 %v166
    %730 = vmatpush1.msra.mxu0 %v165
    %731 = vmatprep.subr.mxu0 %v168
    %732 = vmatpush1.msra.mxu0 %v167
    %733 = vmatprep.subr.mxu0 %v170
    %734 = vmatpush1.msra.mxu0 %v169
    %735 = vmatprep.subr.mxu0 %v172
    %736 = vmatpush1.msra.mxu0 %v171
    %737 = vmatprep.subr.mxu0 %v174
    %738 = vmatpush1.msra.mxu0 %v173
    %739 = vmatprep.subr.mxu0 %v176
    %740 = vmatpush1.msra.mxu0 %v175
    %741 = vmatprep.subr.mxu0 %v178
    %742 = vmatpush1.msra.mxu0 %v177
    %743 = vmatprep.subr.mxu0 %v180
    %744 = vmatpush1.msra.mxu0 %v179
    %745 = vmatprep.mubr.f32.mxu0 %v680
    %746 = vmatmul.mubr.f32.gmra.mrb[0].mxu0 %v671
    %v747 = vpop.f32.mrb[0].mxu0
    %v748 = vadd.f32 0.0, %v747
    %v749 = vpop.f32.mrb[0].mxu0
    %v750 = vadd.f32 0.0, %v749
    %751 = vdwg.mxu0
    %752 = vmatprep.subr.mxu0 %v53
    %753 = vmatpush1.msra.mxu0 %v52
    %754 = vmatprep.subr.mxu0 %v55
    %755 = vmatpush1.msra.mxu0 %v54
    %756 = vmatprep.subr.mxu0 %v57
    %757 = vmatpush1.msra.mxu0 %v56
    %758 = vmatprep.subr.mxu0 %v59
    %759 = vmatpush1.msra.mxu0 %v58
    %760 = vmatprep.subr.mxu0 %v61
    %761 = vmatpush1.msra.mxu0 %v60
    %762 = vmatprep.subr.mxu0 %v63
    %763 = vmatpush1.msra.mxu0 %v62
    %764 = vmatprep.subr.mxu0 %v65
    %765 = vmatpush1.msra.mxu0 %v64
    %766 = vmatprep.subr.mxu0 %v67
    %767 = vmatpush1.msra.mxu0 %v66
    %768 = vmatprep.subr.mxu0 %v69
    %769 = vmatpush1.msra.mxu0 %v68
    %770 = vmatprep.subr.mxu0 %v71
    %771 = vmatpush1.msra.mxu0 %v70
    %772 = vmatprep.subr.mxu0 %v73
    %773 = vmatpush1.msra.mxu0 %v72
    %774 = vmatprep.subr.mxu0 %v75
    %775 = vmatpush1.msra.mxu0 %v74
    %776 = vmatprep.subr.mxu0 %v77
    %777 = vmatpush1.msra.mxu0 %v76
    %778 = vmatprep.subr.mxu0 %v79
    %779 = vmatpush1.msra.mxu0 %v78
    %780 = vmatprep.subr.mxu0 %v81
    %781 = vmatpush1.msra.mxu0 %v80
    %782 = vmatprep.subr.mxu0 %v83
    %783 = vmatpush1.msra.mxu0 %v82
    %784 = vmatprep.subr.mxu0 %v85
    %785 = vmatpush1.msra.mxu0 %v84
    %786 = vmatprep.subr.mxu0 %v87
    %787 = vmatpush1.msra.mxu0 %v86
    %788 = vmatprep.subr.mxu0 %v89
    %789 = vmatpush1.msra.mxu0 %v88
    %790 = vmatprep.subr.mxu0 %v91
    %791 = vmatpush1.msra.mxu0 %v90
    %792 = vmatprep.subr.mxu0 %v93
    %793 = vmatpush1.msra.mxu0 %v92
    %794 = vmatprep.subr.mxu0 %v95
    %795 = vmatpush1.msra.mxu0 %v94
    %796 = vmatprep.subr.mxu0 %v97
    %797 = vmatpush1.msra.mxu0 %v96
    %798 = vmatprep.subr.mxu0 %v99
    %799 = vmatpush1.msra.mxu0 %v98
    %800 = vmatprep.subr.mxu0 %v101
    %801 = vmatpush1.msra.mxu0 %v100
    %802 = vmatprep.subr.mxu0 %v103
    %803 = vmatpush1.msra.mxu0 %v102
    %804 = vmatprep.subr.mxu0 %v105
    %805 = vmatpush1.msra.mxu0 %v104
    %806 = vmatprep.subr.mxu0 %v107
    %807 = vmatpush1.msra.mxu0 %v106
    %808 = vmatprep.subr.mxu0 %v109
    %809 = vmatpush1.msra.mxu0 %v108
    %810 = vmatprep.subr.mxu0 %v111
    %811 = vmatpush1.msra.mxu0 %v110
    %812 = vmatprep.subr.mxu0 %v113
    %813 = vmatpush1.msra.mxu0 %v112
    %814 = vmatprep.subr.mxu0 %v115
    %815 = vmatpush1.msra.mxu0 %v114
    %816 = vmatprep.mubr.f32.mxu0 %v662
    %817 = vmatmul.mubr.f32.gmra.mrb[0].mxu0 %v661
    %v818 = vpop.f32.mrb[0].mxu0
    %v819 = vadd.f32 %v748, %v818
    %v820 = vpop.f32.mrb[0].mxu0
    %v821 = vadd.f32 %v750, %v820
    %822 = vdwg.mxu0
    %v823 = vxor.u32 %v819, 2147483648
    %v824 = vxor.u32 %v821, 2147483648
    %v825 = vmul.f32 %v823, 1.442695
    %v826 = vpow.pop %v825
    %v827 = vmul.f32 %v824, 1.442695
    %v828 = vpow.pop %v827
    %v829 = vadd.f32 %v826, 1.0
    %v830 = vadd.f32 %v828, 1.0
    %v831 = vrcp.pop %v829
    %v832 = vmul.f32 1.0, %v831
    %v833 = vrcp.pop %v830
    %v834 = vmul.f32 1.0, %v833
    %v835 = vlaneseq
    %v836 = vshrl.u32 %v835, 7
    %v837 = vsub.s32 0, %v836
    %v838 = vrot.slane %v832, %v837
    %v839 = vlaneseq
    %v840 = vshrl.u32 %v839, 7
    %v841 = vsub.s32 0, %v840
    %v842 = vrot.slane %v834, %v841
    %v843 = vmul.f32 %v635, %v838
    %v844 = vmul.f32 %v636, %v842
    %v845 = vmul.f32 %v637, %v838
    %v846 = vmul.f32 %v638, %v842
    %v847 = vmul.f32 %v639, %v838
    %v848 = vmul.f32 %v640, %v842
    %v849 = vmul.f32 %v641, %v838
    %v850 = vmul.f32 %v642, %v842
    %s851 = scalar_lea.vmem [#allocation7], 64
    %852 = vst [vmem:[%s851] sm:$0xff] %v843
    %853 = vst [vmem:[%s851 + $0x8] sm:$0xff] %v844
    %854 = vst [vmem:[%s851 + $0x10] sm:$0xff] %v845
    %855 = vst [vmem:[%s851 + $0x18] sm:$0xff] %v846
    %856 = vst [vmem:[%s851 + $0x20] sm:$0xff] %v847
    %857 = vst [vmem:[%s851 + $0x28] sm:$0xff] %v848
    %858 = vst [vmem:[%s851 + $0x30] sm:$0xff] %v849
    %859 = vst [vmem:[%s851 + $0x38] sm:$0xff] %v850
    // Predicated region
    $region22: #{tpu_custom_call.1} parent=1 // pred_check
      _
    $region23: #{tpu_custom_call.1} parent=1 // pred_check_branch
      %861 = sbr.rel (0) target = $region25
    $region24: #{tpu_custom_call.1} parent=1 // pred_region
      %s863 = ssub.s32 2048, 2048
      %864 = vsyncadd [#allocation4], %s863
      %s865 = sshll.u32 [#allocation7], 4
      %s866 = int_to_ptr.vmem [resolvable:$true] %s865
      %871 = dma.vmem_to_hbm [thread:$0]  %s866, 2048, %s3, [#allocation4], 256, 256, 16
    $region25: #{tpu_custom_call.1} parent=1 // pred_fallthru
      _
    // Predicated region
    $region26: #{tpu_custom_call.1} parent=1 // pred_check
      _
    $region27: #{tpu_custom_call.1} parent=1 // pred_check_branch
      %873 = sbr.rel (0) target = $region29
    $region28: #{tpu_custom_call.1} parent=1 // pred_region
      %874 = dma.done [#allocation4], 2048
    $region29: #{tpu_custom_call.1} parent=1 // pred_fallthru
      _
    %875 = vsyncpa [#allocation3], 1
    %876 = vsyncpa [#allocation6], 1
    %877 = vsyncpa [#allocation4], 1

</llo_original>
